<compile_context>
chip_gen: v7x
topology: tpu7x:2x2x1
jax: 0.10.0
libtpu: 0.0.40
codegen_flags: <defaults>
</compile_context>

<pallas_src>
from functools import partial

import jax
import jax.numpy as jnp
from jax.experimental import pallas as pl
from jax.experimental.pallas import tpu as pltpu

NEG_SLOPE = 0.2                       # PyG GATv2Conv default negative_slope
A_COEF = 0.5 * (1.0 + NEG_SLOPE)      # leaky_relu(t) = A*t + B*|t|
B_COEF = 0.5 * (1.0 - NEG_SLOPE)


# ----------------------------- kernels ------------------------------------ #

def lin_proj_kernel(x_ref, w_ref, b_ref, o_ref):
    """[TM, F_in] @ [F_in, PROJ_PAD] + b -> [TM, PROJ_PAD] (lin_l|lin_r fused,
    weight columns zero-padded to a multiple of 128 lanes -> unmasked stores)."""
    o_ref[...] = (jnp.dot(x_ref[...], w_ref[...],
                          preferred_element_type=jnp.float32) + b_ref[...])


def gatv2_attn_kernel(counts_ref, jmap_ref, xr_ref, xlT_ref, v_ref, adj_ref,
                      batt_ref, bias_ref, out_ref, m_sc, l_sc, acc_sc,
                      *, heads, cdim, out_pad):
    """One (target-row-block, source-col-block) step of GATv2 attention.

    counts_ref: [nR*nC] int32 SMEM  edges per adjacency block (scalar prefetch)
    jmap_ref  : [nR*nC] int32 SMEM  col-block remap (used by index_maps only)
    xr_ref    : [TM, H*C]  lin_r(x) rows of this target block
    xlT_ref   : [H*C, TN]  lin_l(x) transposed, sources lane-dense (col block)
    v_ref     : [VH, TN]   per-source linear score part  A*att_h . xl_j
    adj_ref   : [TM, TN]   dense adjacency block (value = edge multiplicity)
    batt_ref  : [H, C] SMEM  B*att scalars
    bias_ref  : [1, out_pad]  zero-padded output bias
    out_ref   : [TM, out_pad] written on the last column step only
    m_sc/l_sc : [H, TM, 1]   online-softmax running max / denominator
    acc_sc    : [H, TM, C]   running weighted sums
    """
    H, C = heads, cdim
    i = pl.program_id(0)
    j = pl.program_id(1)
    n_col = pl.num_programs(1)
    tm = xr_ref.shape[0]

    @pl.when(j == 0)
    def _init():
        m_sc[...] = jnp.full(m_sc.shape, -1e30, m_sc.dtype)
        l_sc[...] = jnp.zeros(l_sc.shape, l_sc.dtype)
        acc_sc[...] = jnp.zeros(acc_sc.shape, acc_sc.dtype)

    @pl.when(counts_ref[i * n_col + j] > 0)        # skip empty adjacency blocks
    def _block():
        adj = adj_ref[...]                          # [TM, TN]
        neg_mask = jnp.where(adj > 0.0, 0.0, -1e30)  # shared by all heads
        for h in range(H):                          # static unroll (H small)
            # e_ij = v_j + sum_c (B*att_hc)*|xr_i,hc + xl_j,hc|
            # (the per-target term u_i cancels inside softmax).
            e = None
            for c in range(C):
                k = h * C + c
                col = xr_ref[:, k:k + 1]            # [TM, 1] lane broadcast
                row = xlT_ref[k:k + 1, :]           # [1, TN] sublane broadcast
                term = batt_ref[h, c] * jnp.abs(col + row)
                if e is None:
                    e = v_ref[h:h + 1, :] + term    # fold v_j into first term
                else:
                    e = e + term
            e = e + neg_mask
            # online softmax update for this column block
            m_old = m_sc[h]                                           # [TM, 1]
            m_new = jnp.maximum(m_old, jnp.max(e, axis=1, keepdims=True))
            scale = jnp.exp(m_old - m_new)
            p = jnp.exp(e - m_new) * adj            # adj carries multiplicity
            l_sc[h] = scale * l_sc[h] + jnp.sum(p, axis=1, keepdims=True)
            # aggregate straight from the xlT tile: [TM,TN] x [C,TN]^T -> [TM,C]
            xl_h = xlT_ref[h * C:(h + 1) * C, :]
            agg = jax.lax.dot_general(p, xl_h, (((1,), (1,)), ((), ())),
                                      preferred_element_type=jnp.float32)
            acc_sc[h] = scale * acc_sc[h] + agg
            m_sc[h] = m_new

    @pl.when(j == n_col - 1)
    def _finalize():
        parts = []
        for h in range(H):
            denom = l_sc[h] + 1e-16
            inv = pl.reciprocal(denom, approx=True)  # EUP slot
            inv = inv * (2.0 - denom * inv)          # one Newton step -> ~f32
            parts.append(acc_sc[h] * inv)            # [TM, C]
        pad_cols = out_pad - H * C
        if pad_cols > 0:
            parts.append(jnp.zeros((tm, pad_cols), jnp.float32))
        # single lane-dense (multiple-of-128) store
        out_ref[...] = jnp.concatenate(parts, axis=1) + bias_ref[...]


# ----------------------------- wrapper ------------------------------------ #

def _largest_divisor(n, align, cap):
    best = None
    c = align
    while c <= min(cap, n):
        if n % c == 0:
            best = c
        c += align
    return best


def _pick_block_m(n, cap=256):
    """Row-block size: multiple-of-8 divisor of n; prefer >= 2 grid steps."""
    if n % 8 != 0:
        # TODO(synk): pad N to a multiple of 8 instead of one huge row block.
        return n
    b = _largest_divisor(n, 8, min(cap, max(8, n // 2)))
    return b if b is not None else n


def _pick_block_n(n, cap=1024):
    """Column-block size: multiple-of-128 divisor of n, else the full axis."""
    if n % 128 != 0:
        return n
    b = _largest_divisor(n, 128, cap)
    return b if b is not None else n


def _vmem_limit_bytes():
    # ~3/4 of physical VMEM, capped at 96 MiB (=> ~48 MiB on v7x's 64 MiB/TC).
    try:
        cap = pltpu.get_tpu_info().vmem_capacity_bytes
        return int(min(cap * 3 // 4, 96 * 1024 * 1024))
    except Exception:
        return 64 * 1024 * 1024


def gatv2_forward(x, edge_index, params, heads, out_per_head,
                  block_m=None, block_n=None):
    """Returns (out [N, heads*out_per_head], edge_index), like the torch module."""
    N, F_in = x.shape
    H, C = heads, out_per_head
    HC = H * C
    OUT_PAD = ((HC + 127) // 128) * 128          # lane-dense output slab width
    PROJ_PAD = ((2 * HC + 127) // 128) * 128     # lane-dense projection width

    if block_m is None:
        block_m = _pick_block_m(N)
    if block_n is None:
        block_n = _pick_block_n(N)
    assert N % block_m == 0 and N % block_n == 0, "blocks must divide N"
    nR, nC = N // block_m, N // block_n

    # Dense adjacency with multiplicity: duplicate edges sum like PyG messages.
    src, dst = edge_index[0], edge_index[1]
    adj = jnp.zeros((N, N), jnp.float32).at[dst, src].add(1.0)

    # Per-block edge counts (block-sparsity table) and "last non-empty column
    # block" remap, both scalar-prefetched to SMEM.
    counts = adj.reshape(nR, block_m, nC, block_n).sum(axis=(1, 3)).astype(jnp.int32)
    col_idx = jnp.broadcast_to(jnp.arange(nC, dtype=jnp.int32)[None, :], (nR, nC))
    cand = jnp.where(counts > 0, col_idx, jnp.int32(-1))
    jmap = jnp.maximum(jax.lax.cummax(cand, axis=1), 0).astype(jnp.int32)
    counts_flat = counts.reshape(-1)
    jmap_flat = jmap.reshape(-1)

    vmem_limit = _vmem_limit_bytes()

    # --- projections: one fused matmul for lin_l | lin_r, lane-dense output --
    w_cat = jnp.concatenate([params["wl"].T, params["wr"].T],
                            axis=1).astype(jnp.float32)            # [F_in, 2HC]
    w_pad = jnp.zeros((F_in, PROJ_PAD), jnp.float32).at[:, :2 * HC].set(w_cat)
    b_pad = jnp.zeros((1, PROJ_PAD), jnp.float32).at[0, :2 * HC].set(
        jnp.concatenate([params["bl"], params["br"]]).astype(jnp.float32))

    proj = pl.pallas_call(
        lin_proj_kernel,
        out_shape=jax.ShapeDtypeStruct((N, PROJ_PAD), jnp.float32),
        grid=(nR,),
        in_specs=[pl.BlockSpec((block_m, F_in), lambda i: (i, 0)),
                  pl.BlockSpec((F_in, PROJ_PAD), lambda i: (0, 0)),
                  pl.BlockSpec((1, PROJ_PAD), lambda i: (0, 0))],
        out_specs=pl.BlockSpec((block_m, PROJ_PAD), lambda i: (i, 0)),
        compiler_params=pltpu.CompilerParams(
            dimension_semantics=("parallel",),
            vmem_limit_bytes=vmem_limit),
    )(x.astype(jnp.float32), w_pad, b_pad)

    xl = proj[:, :HC]                            # lin_l(x)  [N, HC]
    xr = proj[:, HC:2 * HC]                      # lin_r(x)  [N, HC]

    att = params["att"].astype(jnp.float32)      # [H, C]
    # Source-side linear part of the leaky-relu split (target side cancels in
    # softmax).  Tiny matvec in XLA; padded to 8 sublanes for a clean BlockSpec.
    vsrc = jnp.einsum("nhc,hc->hn", xl.reshape(N, H, C), A_COEF * att)  # [H, N]
    VH = ((H + 7) // 8) * 8
    v_pad = jnp.zeros((VH, N), jnp.float32).at[:H].set(vsrc)
    batt = B_COEF * att                          # [H, C] -> SMEM scalars

    xlT = xl.T                                   # [HC, N] sources lane-dense
    bias_pad = jnp.zeros((1, OUT_PAD), jnp.float32).at[0, :HC].set(
        params["bias"].astype(jnp.float32))

    remap_col = lambda i, j, cnt, jm: (0, jm[i * nC + j])
    kernel = partial(gatv2_attn_kernel, heads=H, cdim=C, out_pad=OUT_PAD)
    out_slab = pl.pallas_call(
        kernel,
        out_shape=jax.ShapeDtypeStruct((N, OUT_PAD), jnp.float32),
        grid_spec=pltpu.PrefetchScalarGridSpec(
            num_scalar_prefetch=2,
            grid=(nR, nC),
            in_specs=[
                pl.BlockSpec((block_m, HC), lambda i, j, cnt, jm: (i, 0)),   # xr
                pl.BlockSpec((HC, block_n), remap_col),                      # xlT
                pl.BlockSpec((VH, block_n), remap_col),                      # v
                pl.BlockSpec((block_m, block_n),
                             lambda i, j, cnt, jm: (i, jm[i * nC + j])),     # adj
                pl.BlockSpec(memory_space=pltpu.MemorySpace.SMEM),           # B*att
                pl.BlockSpec((1, OUT_PAD), lambda i, j, cnt, jm: (0, 0)),    # bias
            ],
            out_specs=pl.BlockSpec((block_m, OUT_PAD),
                                   lambda i, j, cnt, jm: (i, 0)),
            scratch_shapes=[pltpu.VMEM((H, block_m, 1), jnp.float32),
                            pltpu.VMEM((H, block_m, 1), jnp.float32),
                            pltpu.VMEM((H, block_m, C), jnp.float32)]),
        compiler_params=pltpu.CompilerParams(
            dimension_semantics=("parallel", "arbitrary"),
            vmem_limit_bytes=vmem_limit),
    )(counts_flat, jmap_flat, xr, xlT, v_pad, adj, batt, bias_pad)

    return out_slab[:, :HC], edge_index


# ----------------------------- reference ---------------------------------- #

def reference(x, edge_index, params, H, C):
    """Pure-JAX edge-list reference (mirrors PyG GATv2 message passing)."""
    N = x.shape[0]
    xl = (x @ params["wl"].T + params["bl"]).reshape(N, H, C)
    xr = (x @ params["wr"].T + params["br"]).reshape(N, H, C)
    src, dst = edge_index[0], edge_index[1]
    s = xr[dst] + xl[src]                                  # [E, H, C]
    s = jnp.where(s > 0, s, NEG_SLOPE * s)
    e = jnp.sum(s * params["att"][None], axis=-1)          # [E, H]
    emax = jnp.full((N, H), -jnp.inf, jnp.float32).at[dst].max(e)
    p = jnp.exp(e - emax[dst])
    denom = jnp.zeros((N, H), jnp.float32).at[dst].add(p)
    alpha = p / denom[dst]
    out = jnp.zeros((N, H, C), jnp.float32).at[dst].add(alpha[..., None] * xl[src])
    return out.reshape(N, H * C) + params["bias"][None]


# ------------------------------- main -------------------------------------- #

if __name__ == "__main__":
    key = jax.random.PRNGKey(0)
    # GATv2ConvRnd(in_channels=16, out_channels=32, depth=1, heads=4)
    # depth > 0 -> concat=True, per-head channels C = 32 // 4 = 8
    N, F_in = 256, 16
    heads, out_channels = 4, 32
    C = out_channels // heads

    ks = jax.random.split(key, 7)
    x = jax.random.normal(ks[0], (N, F_in), jnp.float32)
    params = {
        "wl":  jax.random.normal(ks[1], (heads * C, F_in), jnp.float32) * 0.2,
        "wr":  jax.random.normal(ks[2], (heads * C, F_in), jnp.float32) * 0.2,
        "bl":  jax.random.normal(ks[3], (heads * C,), jnp.float32) * 0.1,
        "br":  jax.random.normal(ks[4], (heads * C,), jnp.float32) * 0.1,
        "att": jax.random.normal(ks[5], (heads, C), jnp.float32) * 0.2,
        "bias": jax.random.normal(ks[6], (heads * C,), jnp.float32) * 0.1,
    }

    # Deterministic duplicate-free edge list: self-loops + two ring shifts.
    # The band structure leaves some (row-block, col-block) adjacency blocks
    # empty, exercising the block-skip / DMA-remap path.
    loops = jnp.arange(N, dtype=jnp.int32)
    src = jnp.concatenate([loops, loops, loops])
    dst = jnp.concatenate([loops, (loops + 1) % N, (loops + 5) % N])
    edge_index = jnp.stack([src, dst])                     # [2, 768]

    # block_m=64, block_n=128 -> (4, 2) grid: multi-step "parallel" row axis
    # and a multi-step online-softmax column axis are both exercised.
    out, ei = gatv2_forward(x, edge_index, params, heads, C,
                            block_m=64, block_n=128)
    out = jax.block_until_ready(out)

    ref = reference(x, edge_index, params, heads, C)
    assert out.shape == (N, heads * C)
    err = float(jnp.max(jnp.abs(out - ref)))
    assert jnp.allclose(out, ref, atol=1e-3, rtol=1e-3), err
    print("KERNEL_OK")
</pallas_src>

<mosaic_0001>
module attributes {stable_mosaic.version = 11 : i64} {
  func.func @lin_proj_kernel(%arg0: i32, %arg1: memref<64x16xf32, #tpu.memory_space<vmem>>, %arg2: memref<16x128xf32, #tpu.memory_space<vmem>>, %arg3: memref<1x128xf32, #tpu.memory_space<vmem>>, %arg4: memref<64x128xf32, #tpu.memory_space<vmem>>) attributes {dimension_semantics = [#tpu.dimension_semantics<parallel>], iteration_bounds = array<i64: 4>, scalar_prefetch = 0 : i64, scratch_operands = 0 : i64, tpu.core_type = #tpu.core_type<tc>, window_params = [{transform_indices = @transform_0, window_bounds = array<i64: 64, 16>}, {pipeline_mode = #tpu.pipeline_mode<synchronous>, transform_indices = @transform_1, window_bounds = array<i64: 16, 128>}, {pipeline_mode = #tpu.pipeline_mode<synchronous>, transform_indices = @transform_2, window_bounds = array<i64: 1, 128>}, {transform_indices = @transform_3, window_bounds = array<i64: 64, 128>}]} {
    %c0 = arith.constant 0 : index
    %c0_0 = arith.constant 0 : index
    %0 = vector.load %arg1[%c0, %c0_0] : memref<64x16xf32, #tpu.memory_space<vmem>>, vector<64x16xf32>
    %c0_1 = arith.constant 0 : index
    %c0_2 = arith.constant 0 : index
    %1 = vector.load %arg2[%c0_1, %c0_2] : memref<16x128xf32, #tpu.memory_space<vmem>>, vector<16x128xf32>
    %cst = arith.constant dense<0.000000e+00> : vector<64x128xf32>
    %2 = tpu.matmul %0, %1, %cst {dimension_numbers = #tpu.dot_dimension_numbers<[1], [0], [0], [1], [0, 0, 1, 1], [], []>} : vector<64x16xf32>, vector<16x128xf32>, vector<64x128xf32> -> vector<64x128xf32>
    %c0_3 = arith.constant 0 : index
    %c0_4 = arith.constant 0 : index
    %3 = vector.load %arg3[%c0_3, %c0_4] : memref<1x128xf32, #tpu.memory_space<vmem>>, vector<1x128xf32>
    %4 = vector.broadcast %3 : vector<1x128xf32> to vector<64x128xf32>
    %5 = arith.addf %2, %4 : vector<64x128xf32>
    %c0_5 = arith.constant 0 : index
    %c0_6 = arith.constant 0 : index
    %6 = vector.load %arg4[%c0_5, %c0_6] : memref<64x128xf32, #tpu.memory_space<vmem>>, vector<64x128xf32>
    tpu.vector_store %arg4[%c0_5, %c0_6], %5 {strides = array<i32>} : memref<64x128xf32, #tpu.memory_space<vmem>>, vector<64x128xf32>,
    return
  }
  func.func @transform_0(%arg0: i32) -> (i32, i32) {
    %c0_i32 = arith.constant 0 : i32
    %c0_i32_0 = arith.constant 0 : i32
    return %arg0, %c0_i32 : i32, i32
  }
  func.func @transform_1(%arg0: i32) -> (i32, i32) {
    %c0_i32 = arith.constant 0 : i32
    %c0_i32_0 = arith.constant 0 : i32
    %c0_i32_1 = arith.constant 0 : i32
    return %c0_i32, %c0_i32_0 : i32, i32
  }
  func.func @transform_2(%arg0: i32) -> (i32, i32) {
    %c0_i32 = arith.constant 0 : i32
    %c0_i32_0 = arith.constant 0 : i32
    %c0_i32_1 = arith.constant 0 : i32
    return %c0_i32, %c0_i32_0 : i32, i32
  }
  func.func @transform_3(%arg0: i32) -> (i32, i32) {
    %c0_i32 = arith.constant 0 : i32
    %c0_i32_0 = arith.constant 0 : i32
    return %arg0, %c0_i32 : i32, i32
  }
}

</mosaic_0001>

<llo_original>
// kernel: tpu_custom_call.1
$region0: #{tpu_custom_call.1}
  #allocation0 [shape = 'u32[]', space=smem, size = 0x4, offset = 0x4, fixed_abs, tag = 'smem constant byte address 0x4 - core index']
  #allocation1 [shape = 'u32[144,128]{1,0:T(1,128)}', space=vmem, size = 0x12000, scoped, tag = 'internal scratch']
  %s0 = inlined_call_operand.hbm [shape: f32[256,16], index: 0, kind: input, shape index: {}]
  %s1 = inlined_call_operand.hbm [shape: f32[16,128], index: 1, kind: input, shape index: {}]
  %s2 = inlined_call_operand.hbm [shape: f32[1,128], index: 2, kind: input, shape index: {}]
  %s3 = inlined_call_operand.hbm [shape: f32[256,128], index: 3, kind: output, shape index: {}]
  %s4 = sld [smem:[#allocation0]]
  $region57: #{tpu_custom_call.1} parent=0
    _
  %s6 = ssub.s32 1, %s4
  %s7 = scalar_select 0, %s6, %s4
  $region1: #{tpu_custom_call.1} parent=0
    #allocation2 [shape = 'u8[65536]{0}', space=vmem, size = 0x10000, scoped, tag = 'input window, operand 0']
    #allocation3 [shape = 's32[2]{0}', space=sflag, size = 0x8, scoped, tag = 'scoped memory for tpu_custom_call.1']
    #allocation4 [shape = 's32[2]{0}', space=sflag, size = 0x8, scoped, tag = 'scoped memory for tpu_custom_call.1']
    #allocation5 [shape = 'u8[8192]{0}', space=vmem, size = 0x2000, scoped, tag = 'input window, operand 1, single buffered']
    #allocation6 [shape = 's32[1]{0}', space=sflag, size = 0x4, scoped, tag = 'scoped memory for tpu_custom_call.1']
    #allocation7 [shape = 'u8[512]{0}', space=vmem, size = 0x400, scoped, tag = 'input window, operand 2, single buffered']
    #allocation8 [shape = 'u8[65536]{0}', space=vmem, size = 0x10000, scoped, tag = 'output window, operand 0']
    %8 = vsyncpa [#allocation3], 0
    %s9 = scalar_lea.sflag [#allocation3], 1
    %10 = vsyncpa %s9, 0
    %11 = vsyncpa [#allocation6], 0
    %12 = vsyncpa [#allocation4], 0
    %s13 = scalar_lea.sflag [#allocation4], 1
    %14 = vsyncpa %s13, 0
    loop: start=0, step=1, limit=6
    $region2: #{tpu_custom_call.1} parent=1 // loop_pre_header
      _
    $region3: #{tpu_custom_call.1} parent=1 // loop_header
      %s16 = sphi 0, %s20
      %p17 = scmp.ge.s32.totalorder %s16, 6
      %s26 = sphi 0, %s28
      %s29 = sphi 0, %s26
      %s30 = sphi 0, %s29
      %s46 = sphi 0, %s30
      %s50 = sphi 0, %s50
      %s52 = sphi 0, %s50
      %s53 = sphi 0, %s52
      %s67 = sphi 0, %s53
      %s71 = sphi 0, %s71
      %s73 = sphi 0, %s71
      %s74 = sphi 0, %s73
      %s88 = sphi 0, %s74
      %s94 = sphi 0, %s96
      %s97 = sphi 0, %s94
      %s98 = sphi 0, %s97
      %s114 = sphi 0, %s98
    $region4: #{tpu_custom_call.1} parent=1 // loop_header_branch
      %19 = sbr.rel (%p17) target = $region8
    $region5: #{tpu_custom_call.1} parent=1 // loop_body
      %s21 = ssub.s32 %s16, 1
      %s22 = ssub.s32 %s16, 2
      %s23 = sadd.s32 %s16, 1
      %s24 = ssub.s32 %s16, %s23
      %p25 = scmp.eq.s32.totalorder %s24, 0
      %s27 = sadd.s32 %s26, 1
      %s28 = scalar_select %p25, %s26, %s27
      %p31 = pneg %p25
      %p32 = scmp.eq.s32.totalorder %s16, 3
      %p33 = por %p31, %p32
      %p34 = scmp.ne.s32.totalorder %s26, %s29
      %p35 = scmp.eq.s32.totalorder %s16, 0
      %p36 = por %p34, %p35
      %p37 = scmp.ne.s32.totalorder %s26, %s29
      %p38 = scmp.eq.s32.totalorder %s21, 3
      %p39 = por %p37, %p38
      %p40 = scmp.ne.s32.totalorder %s29, %s30
      %p41 = scmp.eq.s32.totalorder %s21, 0
      %p42 = por %p40, %p41
      %p43 = scmp.ne.s32.totalorder %s29, %s30
      %p44 = scmp.eq.s32.totalorder %s22, 3
      %p45 = por %p43, %p44
      %p47 = scmp.ne.s32.totalorder %s30, %s46
      %p48 = scmp.eq.s32.totalorder %s22, 0
      %p49 = por %p47, %p48
      %s51 = sadd.s32 %s50, 1
      %p54 = scmp.eq.s32.totalorder %s16, 3
      %p55 = scmp.ne.s32.totalorder %s50, %s52
      %p56 = scmp.eq.s32.totalorder %s16, 0
      %p57 = por %p55, %p56
      %p58 = scmp.ne.s32.totalorder %s50, %s52
      %p59 = scmp.eq.s32.totalorder %s21, 3
      %p60 = por %p58, %p59
      %p61 = scmp.ne.s32.totalorder %s52, %s53
      %p62 = scmp.eq.s32.totalorder %s21, 0
      %p63 = por %p61, %p62
      %p64 = scmp.ne.s32.totalorder %s52, %s53
      %p65 = scmp.eq.s32.totalorder %s22, 3
      %p66 = por %p64, %p65
      %p68 = scmp.ne.s32.totalorder %s53, %s67
      %p69 = scmp.eq.s32.totalorder %s22, 0
      %p70 = por %p68, %p69
      %s72 = sadd.s32 %s71, 1
      %p75 = scmp.eq.s32.totalorder %s16, 3
      %p76 = scmp.ne.s32.totalorder %s71, %s73
      %p77 = scmp.eq.s32.totalorder %s16, 0
      %p78 = por %p76, %p77
      %p79 = scmp.ne.s32.totalorder %s71, %s73
      %p80 = scmp.eq.s32.totalorder %s21, 3
      %p81 = por %p79, %p80
      %p82 = scmp.ne.s32.totalorder %s73, %s74
      %p83 = scmp.eq.s32.totalorder %s21, 0
      %p84 = por %p82, %p83
      %p85 = scmp.ne.s32.totalorder %s73, %s74
      %p86 = scmp.eq.s32.totalorder %s22, 3
      %p87 = por %p85, %p86
      %p89 = scmp.ne.s32.totalorder %s74, %s88
      %p90 = scmp.eq.s32.totalorder %s22, 0
      %p91 = por %p89, %p90
      %s92 = ssub.s32 %s16, %s23
      %p93 = scmp.eq.s32.totalorder %s92, 0
      %s95 = sadd.s32 %s94, 1
      %s96 = scalar_select %p93, %s94, %s95
      %p99 = pneg %p93
      %p100 = scmp.eq.s32.totalorder %s16, 3
      %p101 = por %p99, %p100
      %p102 = scmp.ne.s32.totalorder %s94, %s97
      %p103 = scmp.eq.s32.totalorder %s16, 0
      %p104 = por %p102, %p103
      %p105 = scmp.ne.s32.totalorder %s94, %s97
      %p106 = scmp.eq.s32.totalorder %s21, 3
      %p107 = por %p105, %p106
      %p108 = scmp.ne.s32.totalorder %s97, %s98
      %p109 = scmp.eq.s32.totalorder %s21, 0
      %p110 = por %p108, %p109
      %p111 = scmp.ne.s32.totalorder %s97, %s98
      %p112 = scmp.eq.s32.totalorder %s22, 3
      %p113 = por %p111, %p112
      %p115 = scmp.ne.s32.totalorder %s98, %s114
      %p116 = scmp.eq.s32.totalorder %s22, 0
      %p117 = por %p115, %p116
      %p118 = scmp.le.s32.totalorder 1, %s16
      %p119 = scmp.lt.s32.totalorder %s16, 5
      %p120 = pnand %p118, %p119
      %p121 = pneg %p120
      // Predicated region
      $region9: #{tpu_custom_call.1} parent=5 // pred_check
        _
      $region10: #{tpu_custom_call.1} parent=5 // pred_check_branch
        %123 = sbr.rel (%p120) target = $region12
      $region11: #{tpu_custom_call.1} parent=5 // pred_region
        %s124 = ssub.s32 %s16, 1
        // Predicated region
        $region13: #{tpu_custom_call.1} parent=11 // pred_check
          %p125 = pneg %p63
        $region14: #{tpu_custom_call.1} parent=11 // pred_check_branch
          %127 = sbr.rel (%p125) target = $region16
        $region15: #{tpu_custom_call.1} parent=11 // pred_region
          %s129 = ssub.s32 256, 256
          %130 = vsyncadd [#allocation6], %s129
          %s131 = sshll.u32 [#allocation5], 4
          %s132 = int_to_ptr.vmem [resolvable:$true] %s131
          %137 = dma.hbm_to_vmem [thread:$0]  %s1, 256, %s132, [#allocation6], 128, 128, 8
        $region16: #{tpu_custom_call.1} parent=11 // pred_fallthru
          _
        // Predicated region
        $region17: #{tpu_custom_call.1} parent=11 // pred_check
          %p138 = pneg %p84
        $region18: #{tpu_custom_call.1} parent=11 // pred_check_branch
          %140 = sbr.rel (%p138) target = $region20
        $region19: #{tpu_custom_call.1} parent=11 // pred_region
          %s142 = ssub.s32 16, 16
          %143 = vsyncadd [#allocation6], %s142
          %s145 = sshll.u32 [#allocation7], 4
          %s146 = int_to_ptr.vmem [resolvable:$true] %s145
          %148 = dma.hbm_to_vmem [thread:$0]  %s2, 16, %s146, [#allocation6]
        $region20: #{tpu_custom_call.1} parent=11 // pred_fallthru
          _
      $region12: #{tpu_custom_call.1} parent=5 // pred_fallthru
        _
      %p149 = scmp.lt.s32.totalorder %s16, 4
      // Predicated region
      $region21: #{tpu_custom_call.1} parent=5 // pred_check
        %p150 = pneg %p149
      $region22: #{tpu_custom_call.1} parent=5 // pred_check_branch
        %152 = sbr.rel (%p150) target = $region24
      $region23: #{tpu_custom_call.1} parent=5 // pred_region
        // Predicated region
        $region25: #{tpu_custom_call.1} parent=23 // pred_check
          %p153 = pneg %p36
        $region26: #{tpu_custom_call.1} parent=23 // pred_check_branch
          %155 = sbr.rel (%p153) target = $region28
        $region27: #{tpu_custom_call.1} parent=23 // pred_region
          %s156 = sand.u32 %s26, 1
          %s157 = scalar_lea.sflag [#allocation3], %s156
          %s158 = sand.u32 %s26, 1
          %s159 = smul.addr %s158, 64
          %s160 = scalar_lea.vmem [#allocation2], %s159
          %s161 = smul.u32 8, %s16
          %s163 = ssub.s32 1024, 1024
          %164 = vsyncadd %s157, %s163
          %s165 = smul.addr %s161, 128
          %s166 = scalar_lea.hbm %s0, %s165
          %s167 = sshll.u32 %s160, 4
          %s168 = int_to_ptr.vmem [resolvable:$true] %s167
          %173 = dma.hbm_to_vmem [thread:$0]  %s166, 1024, %s168, %s157, 128, 128, 8
        $region28: #{tpu_custom_call.1} parent=23 // pred_fallthru
          _
      $region24: #{tpu_custom_call.1} parent=5 // pred_fallthru
        _
      %p174 = scmp.le.s32.totalorder 1, %s16
      %p175 = scmp.lt.s32.totalorder %s16, 5
      %p176 = pnand %p174, %p175
      %p177 = pneg %p176
      // Predicated region
      $region29: #{tpu_custom_call.1} parent=5 // pred_check
        _
      $region30: #{tpu_custom_call.1} parent=5 // pred_check_branch
        %179 = sbr.rel (%p176) target = $region32
      $region31: #{tpu_custom_call.1} parent=5 // pred_region
        %s180 = ssub.s32 %s16, 1
        %s181 = sand.u32 %s29, 1
        %s182 = scalar_lea.sflag [#allocation3], %s181
        %s183 = sand.u32 %s29, 1
        %s184 = smul.addr %s183, 64
        %s185 = scalar_lea.vmem [#allocation2], %s184
        // Predicated region
        $region33: #{tpu_custom_call.1} parent=31 // pred_check
          %p186 = pneg %p42
        $region34: #{tpu_custom_call.1} parent=31 // pred_check_branch
          %188 = sbr.rel (%p186) target = $region36
        $region35: #{tpu_custom_call.1} parent=31 // pred_region
          %189 = dma.done %s182, 1024
        $region36: #{tpu_custom_call.1} parent=31 // pred_fallthru
          _
        // Predicated region
        $region37: #{tpu_custom_call.1} parent=31 // pred_check
          %p190 = pneg %p63
        $region38: #{tpu_custom_call.1} parent=31 // pred_check_branch
          %192 = sbr.rel (%p190) target = $region40
        $region39: #{tpu_custom_call.1} parent=31 // pred_region
          %193 = dma.done [#allocation6], 256
        $region40: #{tpu_custom_call.1} parent=31 // pred_fallthru
          _
        // Predicated region
        $region41: #{tpu_custom_call.1} parent=31 // pred_check
          %p194 = pneg %p84
        $region42: #{tpu_custom_call.1} parent=31 // pred_check_branch
          %196 = sbr.rel (%p194) target = $region44
        $region43: #{tpu_custom_call.1} parent=31 // pred_region
          %197 = dma.done [#allocation6], 16
        $region44: #{tpu_custom_call.1} parent=31 // pred_fallthru
          _
        %s198 = sand.u32 %s29, 1
        %s199 = scalar_lea.sflag [#allocation3], %s198
        %s200 = sand.u32 %s29, 1
        %s201 = smul.addr %s200, 64
        %s202 = scalar_lea.vmem [#allocation2], %s201
        %p203 = pneg %p42
        %p204 = pneg %p39
        %p205 = pneg %p63
        %p206 = pneg %p60
        %p207 = pneg %p84
        %p208 = pneg %p81
        %p209 = pneg %p110
        %p210 = pneg %p107
        %s211 = sand.u32 %s97, 1
        %s212 = scalar_lea.sflag [#allocation4], %s211
        %s213 = sand.u32 %s97, 1
        %s214 = smul.addr %s213, 64
        %s215 = scalar_lea.vmem [#allocation8], %s214
        %s216 = smul.u32 8, %s21
        %s217 = smul.u32 8, %s21
        %v218 = vld [vmem:[%s185] sm:$0xff]
        %v219 = vld [vmem:[%s185 + $0x8] sm:$0xff]
        %v220 = vld [vmem:[%s185 + $0x10] sm:$0xff]
        %v221 = vld [vmem:[%s185 + $0x18] sm:$0xff]
        %v222 = vld [vmem:[%s185 + $0x20] sm:$0xff]
        %v223 = vld [vmem:[%s185 + $0x28] sm:$0xff]
        %v224 = vld [vmem:[%s185 + $0x30] sm:$0xff]
        %v225 = vld [vmem:[%s185 + $0x38] sm:$0xff]
        %v226 = vld [vmem:[#allocation5] sm:$0xff]
        %v227 = vld [vmem:[#allocation5 + $0x8] sm:$0xff]
        %v228 = vld [vmem:[#allocation7] sm:$0x1]
        %v230 = vlaneseq
        %v231 = vshrl.u32 %v230, 7
        %v232 = vsub.s32 0, %v231
        %v233 = vrot.slane %v228, %v232
        %vm235 = vcmask 130048
        %v237 = vsel %vm235, %v218, 0
        %v240 = vsel %vm235, %v219, 0
        %v243 = vsel %vm235, %v220, 0
        %v246 = vsel %vm235, %v221, 0
        %v249 = vsel %vm235, %v222, 0
        %v252 = vsel %vm235, %v223, 0
        %v255 = vsel %vm235, %v224, 0
        %v258 = vsel %vm235, %v225, 0
        %260 = vmatprep.subr.mxu0 0.0
        %261 = vmatpush1.msra.mxu0 %v226
        %262 = vmatprep.subr.mxu0 0.0
        %263 = vmatpush1.msra.mxu0 %v227
        %264 = vmatprep.subr.mxu0 0.0
        %265 = vmatpush1.msra.mxu0 0.0
        %266 = vmatprep.subr.mxu0 0.0
        %267 = vmatpush1.msra.mxu0 0.0
        %268 = vmatprep.subr.mxu0 0.0
        %269 = vmatpush1.msra.mxu0 0.0
        %270 = vmatprep.subr.mxu0 0.0
        %271 = vmatpush1.msra.mxu0 0.0
        %272 = vmatprep.subr.mxu0 0.0
        %273 = vmatpush1.msra.mxu0 0.0
        %274 = vmatprep.subr.mxu0 0.0
        %275 = vmatpush1.msra.mxu0 0.0
        %276 = vmatprep.subr.mxu0 0.0
        %277 = vmatpush1.msra.mxu0 0.0
        %278 = vmatprep.subr.mxu0 0.0
        %279 = vmatpush1.msra.mxu0 0.0
        %280 = vmatprep.subr.mxu0 0.0
        %281 = vmatpush1.msra.mxu0 0.0
        %282 = vmatprep.subr.mxu0 0.0
        %283 = vmatpush1.msra.mxu0 0.0
        %284 = vmatprep.subr.mxu0 0.0
        %285 = vmatpush1.msra.mxu0 0.0
        %286 = vmatprep.subr.mxu0 0.0
        %287 = vmatpush1.msra.mxu0 0.0
        %288 = vmatprep.subr.mxu0 0.0
        %289 = vmatpush1.msra.mxu0 0.0
        %290 = vmatprep.subr.mxu0 0.0
        %291 = vmatpush1.msra.mxu0 0.0
        %292 = vmatprep.subr.mxu0 0.0
        %293 = vmatpush1.msra.mxu0 0.0
        %294 = vmatprep.subr.mxu0 0.0
        %295 = vmatpush1.msra.mxu0 0.0
        %296 = vmatprep.subr.mxu0 0.0
        %297 = vmatpush1.msra.mxu0 0.0
        %298 = vmatprep.subr.mxu0 0.0
        %299 = vmatpush1.msra.mxu0 0.0
        %300 = vmatprep.subr.mxu0 0.0
        %301 = vmatpush1.msra.mxu0 0.0
        %302 = vmatprep.subr.mxu0 0.0
        %303 = vmatpush1.msra.mxu0 0.0
        %304 = vmatprep.subr.mxu0 0.0
        %305 = vmatpush1.msra.mxu0 0.0
        %306 = vmatprep.subr.mxu0 0.0
        %307 = vmatpush1.msra.mxu0 0.0
        %308 = vmatprep.subr.mxu0 0.0
        %309 = vmatpush1.msra.mxu0 0.0
        %310 = vmatprep.subr.mxu0 0.0
        %311 = vmatpush1.msra.mxu0 0.0
        %312 = vmatprep.subr.mxu0 0.0
        %313 = vmatpush1.msra.mxu0 0.0
        %314 = vmatprep.subr.mxu0 0.0
        %315 = vmatpush1.msra.mxu0 0.0
        %316 = vmatprep.subr.mxu0 0.0
        %317 = vmatpush1.msra.mxu0 0.0
        %318 = vmatprep.subr.mxu0 0.0
        %319 = vmatpush1.msra.mxu0 0.0
        %320 = vmatprep.subr.mxu0 0.0
        %321 = vmatpush1.msra.mxu0 0.0
        %322 = vmatprep.subr.mxu0 0.0
        %323 = vmatpush1.msra.mxu0 0.0
        %324 = vmatprep.mubr.f32.mxu0 0.0
        %325 = vmatmul.mubr.f32.gmra.mrb[0].mxu0 %v237
        %v326 = vpop.f32.mrb[0].mxu0
        %v327 = vadd.f32 %v233, %v326
        %v328 = vpop.f32.mrb[0].mxu0
        %329 = vmatprep.mubr.f32.mxu0 0.0
        %330 = vmatmul.mubr.f32.gmra.mrb[0].mxu0 %v240
        %v331 = vpop.f32.mrb[0].mxu0
        %v332 = vadd.f32 %v233, %v331
        %v333 = vpop.f32.mrb[0].mxu0
        %334 = vmatprep.mubr.f32.mxu0 0.0
        %335 = vmatmul.mubr.f32.gmra.mrb[0].mxu0 %v243
        %v336 = vpop.f32.mrb[0].mxu0
        %v337 = vadd.f32 %v233, %v336
        %v338 = vpop.f32.mrb[0].mxu0
        %339 = vmatprep.mubr.f32.mxu0 0.0
        %340 = vmatmul.mubr.f32.gmra.mrb[0].mxu0 %v246
        %v341 = vpop.f32.mrb[0].mxu0
        %v342 = vadd.f32 %v233, %v341
        %v343 = vpop.f32.mrb[0].mxu0
        %344 = vmatprep.mubr.f32.mxu0 0.0
        %345 = vmatmul.mubr.f32.gmra.mrb[0].mxu0 %v249
        %v346 = vpop.f32.mrb[0].mxu0
        %v347 = vadd.f32 %v233, %v346
        %v348 = vpop.f32.mrb[0].mxu0
        %349 = vmatprep.mubr.f32.mxu0 0.0
        %350 = vmatmul.mubr.f32.gmra.mrb[0].mxu0 %v252
        %v351 = vpop.f32.mrb[0].mxu0
        %v352 = vadd.f32 %v233, %v351
        %v353 = vpop.f32.mrb[0].mxu0
        %354 = vmatprep.mubr.f32.mxu0 0.0
        %355 = vmatmul.mubr.f32.gmra.mrb[0].mxu0 %v255
        %v356 = vpop.f32.mrb[0].mxu0
        %v357 = vadd.f32 %v233, %v356
        %v358 = vpop.f32.mrb[0].mxu0
        %359 = vmatprep.mubr.f32.mxu0 0.0
        %360 = vmatmul.mubr.f32.gmra.mrb[0].mxu0 %v258
        %v361 = vpop.f32.mrb[0].mxu0
        %v362 = vadd.f32 %v233, %v361
        %v363 = vpop.f32.mrb[0].mxu0
        %364 = vdwg.mxu0
        %365 = vst [vmem:[%s215] sm:$0xff] %v327
        %366 = vst [vmem:[%s215 + $0x8] sm:$0xff] %v332
        %367 = vst [vmem:[%s215 + $0x10] sm:$0xff] %v337
        %368 = vst [vmem:[%s215 + $0x18] sm:$0xff] %v342
        %369 = vst [vmem:[%s215 + $0x20] sm:$0xff] %v347
        %370 = vst [vmem:[%s215 + $0x28] sm:$0xff] %v352
        %371 = vst [vmem:[%s215 + $0x30] sm:$0xff] %v357
        %372 = vst [vmem:[%s215 + $0x38] sm:$0xff] %v362
        %s373 = sand.u32 %s97, 1
        %s374 = scalar_lea.sflag [#allocation4], %s373
        %s375 = sand.u32 %s97, 1
        %s376 = smul.addr %s375, 64
        %s377 = scalar_lea.vmem [#allocation8], %s376
        // Predicated region
        $region45: #{tpu_custom_call.1} parent=31 // pred_check
          %p378 = pneg %p107
        $region46: #{tpu_custom_call.1} parent=31 // pred_check_branch
          %380 = sbr.rel (%p378) target = $region48
        $region47: #{tpu_custom_call.1} parent=31 // pred_region
          %s381 = smul.u32 8, %s21
          %s383 = ssub.s32 1024, 1024
          %384 = vsyncadd %s374, %s383
          %s385 = smul.addr %s381, 128
          %s386 = scalar_lea.hbm %s3, %s385
          %s387 = sshll.u32 %s377, 4
          %s388 = int_to_ptr.vmem [resolvable:$true] %s387
          %393 = dma.vmem_to_hbm [thread:$0]  %s388, 1024, %s386, %s374, 128, 128, 8
        $region48: #{tpu_custom_call.1} parent=31 // pred_fallthru
          _
      $region32: #{tpu_custom_call.1} parent=5 // pred_fallthru
        _
      %p394 = scmp.le.s32.totalorder 2, %s16
      // Predicated region
      $region49: #{tpu_custom_call.1} parent=5 // pred_check
        %p395 = pneg %p394
      $region50: #{tpu_custom_call.1} parent=5 // pred_check_branch
        %397 = sbr.rel (%p395) target = $region52
      $region51: #{tpu_custom_call.1} parent=5 // pred_region
        %s398 = ssub.s32 %s16, 2
        // Predicated region
        $region53: #{tpu_custom_call.1} parent=51 // pred_check
          %p399 = pneg %p113
        $region54: #{tpu_custom_call.1} parent=51 // pred_check_branch
          %401 = sbr.rel (%p399) target = $region56
        $region55: #{tpu_custom_call.1} parent=51 // pred_region
          %s402 = sand.u32 %s98, 1
          %s403 = scalar_lea.sflag [#allocation4], %s402
          %s404 = sand.u32 %s98, 1
          %s405 = smul.addr %s404, 64
          %s406 = scalar_lea.vmem [#allocation8], %s405
          %407 = dma.done %s403, 1024
        $region56: #{tpu_custom_call.1} parent=51 // pred_fallthru
          _
      $region52: #{tpu_custom_call.1} parent=5 // pred_fallthru
        _
    $region6: #{tpu_custom_call.1} parent=1 // loop_footer
      %s20 = sadd.s32 1, %s16
    $region7: #{tpu_custom_call.1} parent=1 // loop_footer_branch
      %15 = sbr.rel target = $region3
    $region8: #{tpu_custom_call.1} parent=1 // loop_exit
      _
    %408 = vsyncpa [#allocation3], 1
    %s409 = scalar_lea.sflag [#allocation3], 1
    %410 = vsyncpa %s409, 1
    %411 = vsyncpa [#allocation6], 1
    %412 = vsyncpa [#allocation4], 1
    %s413 = scalar_lea.sflag [#allocation4], 1
    %414 = vsyncpa %s413, 1

</llo_original>
